<compile_context>
chip_gen: v7x
topology: tpu7x:2x2x1
jax: 0.10.0
libtpu: 0.0.40
codegen_flags: <defaults>
</compile_context>

<pallas_src>
import functools

import jax
import jax.numpy as jnp
from jax.experimental import pallas as pl
from jax.experimental.pallas import tpu as pltpu


# ---------------------------------------------------------------------------
# Kernel
# ---------------------------------------------------------------------------
def _decoder_kernel(x_ref, w_ref, b_ref, o_ref):
    """One batch tile: sigmoid(x @ W_fused + b_fused)."""
    x = x_ref[...]
    w = w_ref[...]
    # Optional reduced-precision matmul operands (f32 accumulation on MXU).
    if x.dtype != w.dtype:
        x = x.astype(w.dtype)

    h = jnp.dot(x, w, preferred_element_type=jnp.float32) + b_ref[...]

    # sigmoid(h) = 1 / (1 + exp(-h)):  exp on EUP, approx reciprocal on EUP.
    o_ref[...] = pl.reciprocal(1.0 + jnp.exp(-h), approx=True).astype(o_ref.dtype)


# ---------------------------------------------------------------------------
# Wrappers
# ---------------------------------------------------------------------------
def fuse_decoder_params(params, compute_dtype=jnp.float32):
    """Fold the three affine layers into a single (W, b). Done outside the kernel."""
    w1, b1 = params["w1"], params["b1"]
    w2, b2 = params["w2"], params["b2"]
    w3, b3 = params["w3"], params["b3"]
    w_fused = (w1 @ w2) @ w3                      # (z_dim, out_dim)
    b_fused = (b1 @ w2 + b2) @ w3 + b3            # (1, out_dim)
    # Bias stays f32 (added to the f32 accumulator); weights may be narrowed.
    return w_fused.astype(compute_dtype), b_fused.astype(jnp.float32)


def decoder_forward_fused(x, w_fused, b_fused, *, block_m=1024):
    """x: (B, z_dim).  w_fused: (z_dim, out_dim).  b_fused: (1, out_dim)."""
    B, Z = x.shape
    OUT = w_fused.shape[1]

    # Batch tile: full batch if small, otherwise a multiple-of-8 tile
    # (block_m default sized well under v7x's 64 MiB VMEM with double buffering).
    bm = B if B <= block_m else block_m
    nb = pl.cdiv(B, bm)

    cost = pl.CostEstimate(
        flops=int(2 * B * Z * OUT),
        transcendentals=int(B * OUT),
        bytes_accessed=int(
            x.size * x.dtype.itemsize
            + w_fused.size * w_fused.dtype.itemsize
            + b_fused.size * b_fused.dtype.itemsize
            + B * OUT * 4
        ),
    )

    return pl.pallas_call(
        _decoder_kernel,
        out_shape=jax.ShapeDtypeStruct((B, OUT), jnp.float32),
        grid=(nb,),
        in_specs=[
            pl.BlockSpec((bm, Z), lambda i: (i, 0)),      # x: tiled over batch
            pl.BlockSpec((Z, OUT), lambda i: (0, 0)),     # W_fused: VMEM-resident
            pl.BlockSpec((1, OUT), lambda i: (0, 0)),     # b_fused: VMEM-resident
        ],
        out_specs=pl.BlockSpec((bm, OUT), lambda i: (i, 0)),
        compiler_params=pltpu.CompilerParams(
            dimension_semantics=("parallel",),            # megacore sharding on v7x
        ),
        cost_estimate=cost,
    )(x, w_fused, b_fused)


def decoder_forward(x, params, *, compute_dtype=jnp.float32, block_m=1024):
    w_fused, b_fused = fuse_decoder_params(params, compute_dtype=compute_dtype)
    return decoder_forward_fused(x, w_fused, b_fused, block_m=block_m)


# ---------------------------------------------------------------------------
# Params / reference
# ---------------------------------------------------------------------------
def init_params(key, z_dim, hidden_dim2, hidden_dim1, out_dim):
    """Deterministic synthetic init (PyTorch-like uniform fan-in scaling)."""
    ks = jax.random.split(key, 6)

    def lin(kw, kb, fan_in, fan_out):
        bound = 1.0 / jnp.sqrt(fan_in)
        w = jax.random.uniform(kw, (fan_in, fan_out), jnp.float32, -bound, bound)
        b = jax.random.uniform(kb, (1, fan_out), jnp.float32, -bound, bound)
        return w, b

    w1, b1 = lin(ks[0], ks[1], z_dim, hidden_dim2)
    w2, b2 = lin(ks[2], ks[3], hidden_dim2, hidden_dim1)
    w3, b3 = lin(ks[4], ks[5], hidden_dim1, out_dim)
    return {"w1": w1, "b1": b1, "w2": w2, "b2": b2, "w3": w3, "b3": b3}


def decoder_reference(x, params):
    """Pure-JAX reference matching the original (unfused) module exactly."""
    h = x @ params["w1"] + params["b1"]
    h = h @ params["w2"] + params["b2"]
    h = h @ params["w3"] + params["b3"]
    return jax.nn.sigmoid(h)


# ---------------------------------------------------------------------------
# Self-test
# ---------------------------------------------------------------------------
if __name__ == "__main__":
    # Shapes consistent with the module's forward:
    #   z_dim=16 -> hidden_dim2=32 -> hidden_dim1=64 -> out_dim=128
    B, Z, H2, H1, OUT = 8, 16, 32, 64, 128

    key = jax.random.PRNGKey(0)
    k_x, k_p = jax.random.split(key)
    x = jax.random.normal(k_x, (B, Z), dtype=jnp.float32)
    params = init_params(k_p, Z, H2, H1, OUT)

    ref = decoder_reference(x, params)

    # f32 compute path (tight tolerance; only fold-rounding + approx reciprocal).
    out = decoder_forward(x, params, compute_dtype=jnp.float32)
    out = jax.block_until_ready(out)
    assert out.shape == (B, OUT), out.shape
    assert jnp.allclose(out, ref, atol=2e-3, rtol=2e-3), "f32 mismatch vs reference"

    # bf16 matmul operands with f32 accumulation (v5e-friendly path).
    out_bf16 = decoder_forward(x, params, compute_dtype=jnp.bfloat16)
    out_bf16 = jax.block_until_ready(out_bf16)
    assert out_bf16.shape == (B, OUT), out_bf16.shape
    assert jnp.allclose(out_bf16, ref, atol=3e-2, rtol=3e-2), "bf16 mismatch vs reference"

    print("KERNEL_OK")
</pallas_src>

<mosaic_0001>
module attributes {stable_mosaic.version = 11 : i64} {
  func.func @_decoder_kernel(%arg0: i32, %arg1: memref<8x16xf32, #tpu.memory_space<vmem>>, %arg2: memref<16x128xf32, #tpu.memory_space<vmem>>, %arg3: memref<1x128xf32, #tpu.memory_space<vmem>>, %arg4: memref<8x128xf32, #tpu.memory_space<vmem>>) attributes {dimension_semantics = [#tpu.dimension_semantics<parallel>], iteration_bounds = array<i64: 1>, scalar_prefetch = 0 : i64, scratch_operands = 0 : i64, tpu.core_type = #tpu.core_type<tc>, window_params = [{transform_indices = @transform_0, window_bounds = array<i64: 8, 16>}, {pipeline_mode = #tpu.pipeline_mode<synchronous>, transform_indices = @transform_1, window_bounds = array<i64: 16, 128>}, {pipeline_mode = #tpu.pipeline_mode<synchronous>, transform_indices = @transform_2, window_bounds = array<i64: 1, 128>}, {transform_indices = @transform_3, window_bounds = array<i64: 8, 128>}]} {
    %c0 = arith.constant 0 : index
    %c0_0 = arith.constant 0 : index
    %0 = vector.load %arg1[%c0, %c0_0] : memref<8x16xf32, #tpu.memory_space<vmem>>, vector<8x16xf32>
    %c0_1 = arith.constant 0 : index
    %c0_2 = arith.constant 0 : index
    %1 = vector.load %arg2[%c0_1, %c0_2] : memref<16x128xf32, #tpu.memory_space<vmem>>, vector<16x128xf32>
    %cst = arith.constant dense<0.000000e+00> : vector<8x128xf32>
    %2 = tpu.matmul %0, %1, %cst {dimension_numbers = #tpu.dot_dimension_numbers<[1], [0], [0], [1], [0, 0, 1, 1], [], []>} : vector<8x16xf32>, vector<16x128xf32>, vector<8x128xf32> -> vector<8x128xf32>
    %c0_3 = arith.constant 0 : index
    %c0_4 = arith.constant 0 : index
    %3 = vector.load %arg3[%c0_3, %c0_4] : memref<1x128xf32, #tpu.memory_space<vmem>>, vector<1x128xf32>
    %4 = vector.broadcast %3 : vector<1x128xf32> to vector<8x128xf32>
    %5 = arith.addf %2, %4 : vector<8x128xf32>
    %cst_5 = arith.constant 0.000000e+00 : f32
    %6 = vector.broadcast %cst_5 : f32 to vector<8x128xf32>
    %7 = arith.subf %6, %5 : vector<8x128xf32>
    %8 = math.exp %7 : vector<8x128xf32>
    %cst_6 = arith.constant 1.000000e+00 : f32
    %9 = vector.broadcast %cst_6 : f32 to vector<8x128xf32>
    %10 = arith.addf %9, %8 : vector<8x128xf32>
    %11 = tpu.reciprocal %10 {approx = true} : vector<8x128xf32> -> vector<8x128xf32>
    %c0_7 = arith.constant 0 : index
    %c0_8 = arith.constant 0 : index
    %12 = vector.load %arg4[%c0_7, %c0_8] : memref<8x128xf32, #tpu.memory_space<vmem>>, vector<8x128xf32>
    tpu.vector_store %arg4[%c0_7, %c0_8], %11 {strides = array<i32>} : memref<8x128xf32, #tpu.memory_space<vmem>>, vector<8x128xf32>,
    return
  }
  func.func @transform_0(%arg0: i32) -> (i32, i32) {
    %c0_i32 = arith.constant 0 : i32
    %c0_i32_0 = arith.constant 0 : i32
    return %arg0, %c0_i32 : i32, i32
  }
  func.func @transform_1(%arg0: i32) -> (i32, i32) {
    %c0_i32 = arith.constant 0 : i32
    %c0_i32_0 = arith.constant 0 : i32
    %c0_i32_1 = arith.constant 0 : i32
    return %c0_i32, %c0_i32_0 : i32, i32
  }
  func.func @transform_2(%arg0: i32) -> (i32, i32) {
    %c0_i32 = arith.constant 0 : i32
    %c0_i32_0 = arith.constant 0 : i32
    %c0_i32_1 = arith.constant 0 : i32
    return %c0_i32, %c0_i32_0 : i32, i32
  }
  func.func @transform_3(%arg0: i32) -> (i32, i32) {
    %c0_i32 = arith.constant 0 : i32
    %c0_i32_0 = arith.constant 0 : i32
    return %arg0, %c0_i32 : i32, i32
  }
}

</mosaic_0001>

<llo_original>
// kernel: tpu_custom_call.1
$region0: #{tpu_custom_call.1}
  #allocation0 [shape = 'u32[]', space=smem, size = 0x4, offset = 0x4, fixed_abs, tag = 'smem constant byte address 0x4 - core index']
  #allocation1 [shape = 'u32[144,128]{1,0:T(1,128)}', space=vmem, size = 0x12000, scoped, tag = 'internal scratch']
  %s0 = inlined_call_operand.hbm [shape: f32[8,16], index: 0, kind: input, shape index: {}]
  %s1 = inlined_call_operand.hbm [shape: f32[16,128], index: 1, kind: input, shape index: {}]
  %s2 = inlined_call_operand.vmem [shape: f32[1,128], index: 2, kind: input, shape index: {}]
  %s3 = inlined_call_operand.hbm [shape: f32[8,128], index: 3, kind: output, shape index: {}]
  %s4 = sld [smem:[#allocation0]]
  $region30: #{tpu_custom_call.1} parent=0
    _
  %s6 = ssub.s32 1, %s4
  %s7 = scalar_select 0, %s6, %s4
  $region1: #{tpu_custom_call.1} parent=0
    #allocation2 [shape = 'u8[4096]{0}', space=vmem, size = 0x1000, scoped, tag = 'input window, operand 0, single buffered']
    #allocation3 [shape = 's32[1]{0}', space=sflag, size = 0x4, scoped, tag = 'scoped memory for tpu_custom_call.1']
    #allocation4 [shape = 's32[1]{0}', space=sflag, size = 0x4, scoped, tag = 'scoped memory for tpu_custom_call.1']
    #allocation5 [shape = 'u8[8192]{0}', space=vmem, size = 0x2000, scoped, tag = 'input window, operand 1, single buffered']
    #allocation6 [shape = 's32[1]{0}', space=sflag, size = 0x4, scoped, tag = 'scoped memory for tpu_custom_call.1']
    #allocation7 [shape = 'u8[4096]{0}', space=vmem, size = 0x1000, scoped, tag = 'output window, operand 0, single buffered']
    %8 = vsyncpa [#allocation3], 0
    %9 = vsyncpa [#allocation6], 0
    %10 = vsyncpa [#allocation4], 0
    // Predicated region
    $region2: #{tpu_custom_call.1} parent=1 // pred_check
      _
    $region3: #{tpu_custom_call.1} parent=1 // pred_check_branch
      %12 = sbr.rel (0) target = $region5
    $region4: #{tpu_custom_call.1} parent=1 // pred_region
      %s14 = ssub.s32 128, 128
      %15 = vsyncadd [#allocation3], %s14
      %s17 = sshll.u32 [#allocation2], 4
      %s18 = int_to_ptr.vmem [resolvable:$true] %s17
      %20 = dma.hbm_to_vmem [thread:$0]  %s0, 128, %s18, [#allocation3]
    $region5: #{tpu_custom_call.1} parent=1 // pred_fallthru
      _
    // Predicated region
    $region6: #{tpu_custom_call.1} parent=1 // pred_check
      _
    $region7: #{tpu_custom_call.1} parent=1 // pred_check_branch
      %22 = sbr.rel (0) target = $region9
    $region8: #{tpu_custom_call.1} parent=1 // pred_region
      %s24 = ssub.s32 256, 256
      %25 = vsyncadd [#allocation6], %s24
      %s26 = sshll.u32 [#allocation5], 4
      %s27 = int_to_ptr.vmem [resolvable:$true] %s26
      %32 = dma.hbm_to_vmem [thread:$0]  %s1, 256, %s27, [#allocation6], 128, 128, 8
    $region9: #{tpu_custom_call.1} parent=1 // pred_fallthru
      _
    // Predicated region
    $region10: #{tpu_custom_call.1} parent=1 // pred_check
      _
    $region11: #{tpu_custom_call.1} parent=1 // pred_check_branch
      %34 = sbr.rel (0) target = $region13
    $region12: #{tpu_custom_call.1} parent=1 // pred_region
      _
    $region13: #{tpu_custom_call.1} parent=1 // pred_fallthru
      _
    // Predicated region
    $region14: #{tpu_custom_call.1} parent=1 // pred_check
      _
    $region15: #{tpu_custom_call.1} parent=1 // pred_check_branch
      %36 = sbr.rel (0) target = $region17
    $region16: #{tpu_custom_call.1} parent=1 // pred_region
      %37 = dma.done [#allocation3], 128
    $region17: #{tpu_custom_call.1} parent=1 // pred_fallthru
      _
    // Predicated region
    $region18: #{tpu_custom_call.1} parent=1 // pred_check
      _
    $region19: #{tpu_custom_call.1} parent=1 // pred_check_branch
      %39 = sbr.rel (0) target = $region21
    $region20: #{tpu_custom_call.1} parent=1 // pred_region
      %40 = dma.done [#allocation6], 256
    $region21: #{tpu_custom_call.1} parent=1 // pred_fallthru
      _
    %v41 = vld [vmem:[#allocation2] sm:$0xff]
    %v42 = vld [vmem:[#allocation5] sm:$0xff]
    %v43 = vld [vmem:[#allocation5 + $0x8] sm:$0xff]
    %v44 = vld [vmem:[%s2] sm:$0x1]
    %v46 = vlaneseq
    %v47 = vshrl.u32 %v46, 7
    %v48 = vsub.s32 0, %v47
    %v49 = vrot.slane %v44, %v48
    %vm51 = vcmask 130048
    %v53 = vsel %vm51, %v41, 0
    %55 = vmatprep.subr.mxu0 0.0
    %56 = vmatpush1.msra.mxu0 %v42
    %57 = vmatprep.subr.mxu0 0.0
    %58 = vmatpush1.msra.mxu0 %v43
    %59 = vmatprep.subr.mxu0 0.0
    %60 = vmatpush1.msra.mxu0 0.0
    %61 = vmatprep.subr.mxu0 0.0
    %62 = vmatpush1.msra.mxu0 0.0
    %63 = vmatprep.subr.mxu0 0.0
    %64 = vmatpush1.msra.mxu0 0.0
    %65 = vmatprep.subr.mxu0 0.0
    %66 = vmatpush1.msra.mxu0 0.0
    %67 = vmatprep.subr.mxu0 0.0
    %68 = vmatpush1.msra.mxu0 0.0
    %69 = vmatprep.subr.mxu0 0.0
    %70 = vmatpush1.msra.mxu0 0.0
    %71 = vmatprep.subr.mxu0 0.0
    %72 = vmatpush1.msra.mxu0 0.0
    %73 = vmatprep.subr.mxu0 0.0
    %74 = vmatpush1.msra.mxu0 0.0
    %75 = vmatprep.subr.mxu0 0.0
    %76 = vmatpush1.msra.mxu0 0.0
    %77 = vmatprep.subr.mxu0 0.0
    %78 = vmatpush1.msra.mxu0 0.0
    %79 = vmatprep.subr.mxu0 0.0
    %80 = vmatpush1.msra.mxu0 0.0
    %81 = vmatprep.subr.mxu0 0.0
    %82 = vmatpush1.msra.mxu0 0.0
    %83 = vmatprep.subr.mxu0 0.0
    %84 = vmatpush1.msra.mxu0 0.0
    %85 = vmatprep.subr.mxu0 0.0
    %86 = vmatpush1.msra.mxu0 0.0
    %87 = vmatprep.subr.mxu0 0.0
    %88 = vmatpush1.msra.mxu0 0.0
    %89 = vmatprep.subr.mxu0 0.0
    %90 = vmatpush1.msra.mxu0 0.0
    %91 = vmatprep.subr.mxu0 0.0
    %92 = vmatpush1.msra.mxu0 0.0
    %93 = vmatprep.subr.mxu0 0.0
    %94 = vmatpush1.msra.mxu0 0.0
    %95 = vmatprep.subr.mxu0 0.0
    %96 = vmatpush1.msra.mxu0 0.0
    %97 = vmatprep.subr.mxu0 0.0
    %98 = vmatpush1.msra.mxu0 0.0
    %99 = vmatprep.subr.mxu0 0.0
    %100 = vmatpush1.msra.mxu0 0.0
    %101 = vmatprep.subr.mxu0 0.0
    %102 = vmatpush1.msra.mxu0 0.0
    %103 = vmatprep.subr.mxu0 0.0
    %104 = vmatpush1.msra.mxu0 0.0
    %105 = vmatprep.subr.mxu0 0.0
    %106 = vmatpush1.msra.mxu0 0.0
    %107 = vmatprep.subr.mxu0 0.0
    %108 = vmatpush1.msra.mxu0 0.0
    %109 = vmatprep.subr.mxu0 0.0
    %110 = vmatpush1.msra.mxu0 0.0
    %111 = vmatprep.subr.mxu0 0.0
    %112 = vmatpush1.msra.mxu0 0.0
    %113 = vmatprep.subr.mxu0 0.0
    %114 = vmatpush1.msra.mxu0 0.0
    %115 = vmatprep.subr.mxu0 0.0
    %116 = vmatpush1.msra.mxu0 0.0
    %117 = vmatprep.subr.mxu0 0.0
    %118 = vmatpush1.msra.mxu0 0.0
    %119 = vmatprep.mubr.f32.mxu0 0.0
    %120 = vmatmul.mubr.f32.gmra.mrb[0].mxu0 %v53
    %v121 = vpop.f32.mrb[0].mxu0
    %v122 = vadd.f32 %v49, %v121
    %v123 = vpop.f32.mrb[0].mxu0
    %124 = vdwg.mxu0
    %v125 = vsub.f32 0.0, %v122
    %v126 = vmul.f32 %v125, 1.442695
    %v127 = vpow.pop %v126
    %v128 = vadd.f32 %v127, 1.0
    %v129 = vrcp.pop %v128
    %130 = vst [vmem:[#allocation7] sm:$0xff] %v129
    // Predicated region
    $region22: #{tpu_custom_call.1} parent=1 // pred_check
      _
    $region23: #{tpu_custom_call.1} parent=1 // pred_check_branch
      %132 = sbr.rel (0) target = $region25
    $region24: #{tpu_custom_call.1} parent=1 // pred_region
      %s134 = ssub.s32 128, 128
      %135 = vsyncadd [#allocation4], %s134
      %s137 = sshll.u32 [#allocation7], 4
      %s138 = int_to_ptr.vmem [resolvable:$true] %s137
      %140 = dma.vmem_to_hbm [thread:$0]  %s138, 128, %s3, [#allocation4]
    $region25: #{tpu_custom_call.1} parent=1 // pred_fallthru
      _
    // Predicated region
    $region26: #{tpu_custom_call.1} parent=1 // pred_check
      _
    $region27: #{tpu_custom_call.1} parent=1 // pred_check_branch
      %142 = sbr.rel (0) target = $region29
    $region28: #{tpu_custom_call.1} parent=1 // pred_region
      %143 = dma.done [#allocation4], 128
    $region29: #{tpu_custom_call.1} parent=1 // pred_fallthru
      _
    %144 = vsyncpa [#allocation3], 1
    %145 = vsyncpa [#allocation6], 1
    %146 = vsyncpa [#allocation4], 1

</llo_original>
